<compile_context>
chip_gen: v7x
topology: tpu7x:2x2x1
jax: 0.10.0
libtpu: 0.0.40
codegen_flags: <defaults>
</compile_context>

<pallas_src>
import math
from functools import partial

import jax
import jax.numpy as jnp
from jax.experimental import pallas as pl
from jax.experimental.pallas import tpu as pltpu


def _round_up(v, m):
    return ((v + m - 1) // m) * m


# ---------------------------------------------------------------------------
# Kernel: lane-dense sin/cos expansion of one (y or x) embed tile per step.
#   emb_ref   : (1, HW_TILE)  f32   — normalized/raw cumsum values
#   inv_ref   : (F, 1)        f32   — 1 / dim_t           (constant, resident)
#   phase_ref : (F, 1)        f32   — 0 (sin) or pi/2 (cos) (constant, resident)
#   out_ref   : (F, HW_TILE)  out_dtype
# One transcendental per output element; (1,HW)*(F,1) broadcasts on the VPU.
# ---------------------------------------------------------------------------
def _expand_kernel(emb_ref, inv_ref, phase_ref, out_ref):
    out_ref[...] = jnp.sin(
        emb_ref[...] * inv_ref[...] + phase_ref[...]
    ).astype(out_ref.dtype)


def position_embedding_sine(x, mask=None, *, num_pos_feats=64, temperature=10000,
                            normalize=False, scale=None, out_dtype=jnp.float32,
                            hw_tile=2048):
    """JAX/Pallas equivalent of PositionEmbeddingSine.forward(x, mask).

    Returns (B, 2*num_pos_feats, H, W); channels [0, F) = pos_y, [F, 2F) = pos_x.
    """
    if scale is not None and normalize is False:
        raise ValueError('normalize should be True if scale is passed')
    if scale is None:
        scale = 2 * math.pi
    scale = float(scale)
    F = num_pos_feats
    eps = 1e-6

    # ----- Stage 1 (tiny): y/x embeds -------------------------------------
    if mask is not None:
        B, H, W = mask.shape
        not_mask = (~mask).astype(jnp.float32)
        y_embed = jnp.cumsum(not_mask, axis=1)
        x_embed = jnp.cumsum(not_mask, axis=2)
        if normalize:
            y_embed = y_embed / (y_embed[:, -1:, :] + eps) * scale
            x_embed = x_embed / (x_embed[:, :, -1:] + eps) * scale
    else:
        # mask=None fast path: cumsum of all-ones == (row/col index + 1).
        if x.ndim == 4:
            B, _, H, W = x.shape
        else:
            B, H, W = x.shape
        yv = jnp.arange(1, H + 1, dtype=jnp.float32)[:, None]      # (H, 1)
        xv = jnp.arange(1, W + 1, dtype=jnp.float32)[None, :]      # (1, W)
        if normalize:
            yv = yv / (H + eps) * scale
            xv = xv / (W + eps) * scale
        y_embed = jnp.broadcast_to(yv[None], (B, H, W))
        x_embed = jnp.broadcast_to(xv[None], (B, H, W))

    HW = H * W
    # (B, 2, 1, HW): slot 0 = y_embed, slot 1 = x_embed (lane-dense layout).
    embeds = jnp.stack([y_embed, x_embed], axis=1).reshape(B, 2, 1, HW)

    # ----- HW tiling: multiple of 128 lanes, <= hw_tile, pad ragged tail ---
    LANE = 128
    hw_tile = max(LANE, _round_up(int(hw_tile), LANE))
    tile = min(hw_tile, _round_up(HW, LANE))
    n_tiles = pl.cdiv(HW, tile)
    HW_pad = n_tiles * tile
    if HW_pad != HW:
        embeds = jnp.pad(embeds, ((0, 0), (0, 0), (0, 0), (0, HW_pad - HW)))

    # ----- Constant per-channel tables (resident across all grid steps) ----
    d = jnp.arange(F, dtype=jnp.float32)
    dim_t = float(temperature) ** (2.0 * jnp.floor(d / 2.0) / F)
    inv_dim_t = (1.0 / dim_t).reshape(F, 1).astype(jnp.float32)            # (F, 1)
    phase = ((d % 2.0) * (0.5 * math.pi)).reshape(F, 1).astype(jnp.float32)  # (F, 1)

    out_bytes = B * 2 * F * HW_pad * jnp.dtype(out_dtype).itemsize
    cost = pl.CostEstimate(
        flops=2 * B * 2 * F * HW_pad,
        transcendentals=B * 2 * F * HW_pad,
        bytes_accessed=out_bytes + B * 2 * HW_pad * 4 + 2 * F * 4,
    )

    # ----- Single pallas_call: grid = (batch, {y, x}, hw_tiles) ------------
    pos = pl.pallas_call(
        _expand_kernel,
        out_shape=jax.ShapeDtypeStruct((B, 2, F, HW_pad), out_dtype),
        grid_spec=pltpu.PrefetchScalarGridSpec(
            num_scalar_prefetch=0,
            grid=(B, 2, n_tiles),
            in_specs=[
                pl.BlockSpec((None, None, 1, tile), lambda b, s, t: (b, s, 0, t)),
                pl.BlockSpec((F, 1), lambda b, s, t: (0, 0)),
                pl.BlockSpec((F, 1), lambda b, s, t: (0, 0)),
            ],
            out_specs=pl.BlockSpec((None, None, F, tile),
                                   lambda b, s, t: (b, s, 0, t)),
        ),
        compiler_params=pltpu.CompilerParams(
            dimension_semantics=("parallel", "parallel", "parallel"),
            vmem_limit_bytes=32 * 1024 * 1024),
        cost_estimate=cost,
    )(embeds, inv_dim_t, phase)

    if HW_pad != HW:
        pos = pos[..., :HW]
    # channels [0, F) = pos_y, [F, 2F) = pos_x; matches torch's cat + permute.
    return pos.reshape(B, 2 * F, H, W)


def _reference(mask, num_pos_feats, temperature, normalize, scale):
    """Pure-JAX transcription of the PyTorch forward, for verification."""
    not_mask = ~mask
    y_embed = jnp.cumsum(not_mask, axis=1, dtype=jnp.float32)
    x_embed = jnp.cumsum(not_mask, axis=2, dtype=jnp.float32)
    if normalize:
        eps = 1e-6
        y_embed = y_embed / (y_embed[:, -1:, :] + eps) * scale
        x_embed = x_embed / (x_embed[:, :, -1:] + eps) * scale
    dim_t = jnp.arange(num_pos_feats, dtype=jnp.float32)
    dim_t = temperature ** (2 * (dim_t // 2) / num_pos_feats)
    pos_x = x_embed[:, :, :, None] / dim_t
    pos_y = y_embed[:, :, :, None] / dim_t
    B, H, W = mask.shape
    pos_x = jnp.stack((jnp.sin(pos_x[:, :, :, 0::2]),
                       jnp.cos(pos_x[:, :, :, 1::2])), axis=4).reshape(B, H, W, -1)
    pos_y = jnp.stack((jnp.sin(pos_y[:, :, :, 0::2]),
                       jnp.cos(pos_y[:, :, :, 1::2])), axis=4).reshape(B, H, W, -1)
    pos = jnp.concatenate((pos_y, pos_x), axis=3).transpose(0, 3, 1, 2)
    return pos


if __name__ == "__main__":
    key = jax.random.PRNGKey(0)
    B, C, H, W = 2, 4, 16, 16
    F = 32

    kx, km = jax.random.split(key)
    x = jax.random.normal(kx, (B, C, H, W), dtype=jnp.float32)   # only shape matters
    mask = jax.random.bernoulli(km, 0.25, (B, H, W))             # bool padding mask

    # 1) default config (masked, normalize=False), f32 output
    out = jax.block_until_ready(position_embedding_sine(x, mask, num_pos_feats=F))
    ref = _reference(mask, F, 10000.0, False, 2 * math.pi)
    assert out.shape == (B, 2 * F, H, W)
    assert jnp.allclose(out, ref, atol=1e-4, rtol=1e-4), "mismatch (normalize=False)"

    # 2) DETR-style config (masked, normalize=True), f32 output
    out_n = jax.block_until_ready(position_embedding_sine(
        x, mask, num_pos_feats=F, normalize=True, scale=2 * math.pi))
    ref_n = _reference(mask, F, 10000.0, True, 2 * math.pi)
    assert jnp.allclose(out_n, ref_n, atol=1e-4, rtol=1e-4), "mismatch (normalize=True)"

    # 3) mask=None fast path + ragged HW (multi-tile with padded tail) + bf16 output
    H2, W2 = 20, 27
    x2 = jax.random.normal(key, (B, C, H2, W2), dtype=jnp.float32)
    out_u = jax.block_until_ready(position_embedding_sine(
        x2, None, num_pos_feats=F, normalize=True,
        out_dtype=jnp.bfloat16, hw_tile=256))
    ref_u = _reference(jnp.zeros((B, H2, W2), dtype=bool), F, 10000.0, True, 2 * math.pi)
    assert out_u.shape == (B, 2 * F, H2, W2)
    assert jnp.allclose(out_u.astype(jnp.float32), ref_u, atol=2e-2, rtol=2e-2), \
        "mismatch (mask=None, bf16)"

    print("KERNEL_OK")
</pallas_src>

<mosaic_0001>
module attributes {stable_mosaic.version = 11 : i64} {
  func.func @_expand_kernel(%arg0: i32, %arg1: i32, %arg2: i32, %arg3: memref<1x1x1x256xf32, #tpu.memory_space<vmem>>, %arg4: memref<32x1xf32, #tpu.memory_space<vmem>>, %arg5: memref<32x1xf32, #tpu.memory_space<vmem>>, %arg6: memref<1x1x32x256xf32, #tpu.memory_space<vmem>>) attributes {dimension_semantics = [#tpu.dimension_semantics<parallel>, #tpu.dimension_semantics<parallel>, #tpu.dimension_semantics<parallel>], iteration_bounds = array<i64: 2, 2, 1>, scalar_prefetch = 0 : i64, scratch_operands = 0 : i64, tpu.core_type = #tpu.core_type<tc>, window_params = [{transform_indices = @transform_0, window_bounds = array<i64: 1, 1, 1, 256>}, {pipeline_mode = #tpu.pipeline_mode<synchronous>, transform_indices = @transform_1, window_bounds = array<i64: 32, 1>}, {pipeline_mode = #tpu.pipeline_mode<synchronous>, transform_indices = @transform_2, window_bounds = array<i64: 32, 1>}, {transform_indices = @transform_3, window_bounds = array<i64: 1, 1, 32, 256>}]} {
    %c0 = arith.constant 0 : index
    %c0_0 = arith.constant 0 : index
    %c0_1 = arith.constant 0 : index
    %c0_2 = arith.constant 0 : index
    %0 = vector.load %arg3[%c0, %c0_0, %c0_1, %c0_2] : memref<1x1x1x256xf32, #tpu.memory_space<vmem>>, vector<1x1x1x256xf32>
    %1 = vector.shape_cast %0 : vector<1x1x1x256xf32> to vector<1x256xf32>
    %c0_3 = arith.constant 0 : index
    %c0_4 = arith.constant 0 : index
    %2 = vector.load %arg4[%c0_3, %c0_4] : memref<32x1xf32, #tpu.memory_space<vmem>>, vector<32x1xf32>
    %3 = vector.broadcast %1 : vector<1x256xf32> to vector<32x256xf32>
    %4 = vector.broadcast %2 : vector<32x1xf32> to vector<32x256xf32>
    %5 = arith.mulf %3, %4 : vector<32x256xf32>
    %c0_5 = arith.constant 0 : index
    %c0_6 = arith.constant 0 : index
    %6 = vector.load %arg5[%c0_5, %c0_6] : memref<32x1xf32, #tpu.memory_space<vmem>>, vector<32x1xf32>
    %7 = vector.broadcast %6 : vector<32x1xf32> to vector<32x256xf32>
    %8 = arith.addf %5, %7 : vector<32x256xf32>
    %9 = math.sin %8 : vector<32x256xf32>
    %c0_7 = arith.constant 0 : index
    %c0_8 = arith.constant 0 : index
    %c0_9 = arith.constant 0 : index
    %c0_10 = arith.constant 0 : index
    %10 = vector.load %arg6[%c0_7, %c0_8, %c0_9, %c0_10] : memref<1x1x32x256xf32, #tpu.memory_space<vmem>>, vector<1x1x32x256xf32>
    %11 = vector.shape_cast %10 : vector<1x1x32x256xf32> to vector<32x256xf32>
    %12 = vector.shape_cast %9 : vector<32x256xf32> to vector<1x1x32x256xf32>
    tpu.vector_store %arg6[%c0_7, %c0_8, %c0_9, %c0_10], %12 {strides = array<i32>} : memref<1x1x32x256xf32, #tpu.memory_space<vmem>>, vector<1x1x32x256xf32>,
    return
  }
  func.func @transform_0(%arg0: i32, %arg1: i32, %arg2: i32) -> (i32, i32, i32, i32) {
    %c0_i32 = arith.constant 0 : i32
    %c0_i32_0 = arith.constant 0 : i32
    return %arg0, %arg1, %c0_i32, %arg2 : i32, i32, i32, i32
  }
  func.func @transform_1(%arg0: i32, %arg1: i32, %arg2: i32) -> (i32, i32) {
    %c0_i32 = arith.constant 0 : i32
    %c0_i32_0 = arith.constant 0 : i32
    %c0_i32_1 = arith.constant 0 : i32
    return %c0_i32, %c0_i32_0 : i32, i32
  }
  func.func @transform_2(%arg0: i32, %arg1: i32, %arg2: i32) -> (i32, i32) {
    %c0_i32 = arith.constant 0 : i32
    %c0_i32_0 = arith.constant 0 : i32
    %c0_i32_1 = arith.constant 0 : i32
    return %c0_i32, %c0_i32_0 : i32, i32
  }
  func.func @transform_3(%arg0: i32, %arg1: i32, %arg2: i32) -> (i32, i32, i32, i32) {
    %c0_i32 = arith.constant 0 : i32
    %c0_i32_0 = arith.constant 0 : i32
    return %arg0, %arg1, %c0_i32, %arg2 : i32, i32, i32, i32
  }
}

</mosaic_0001>

<llo_original>
// kernel: tpu_custom_call.1
$region0: #{tpu_custom_call.1}
  #allocation0 [shape = 'u32[]', space=smem, size = 0x4, offset = 0x4, fixed_abs, tag = 'smem constant byte address 0x4 - core index']
  #allocation1 [shape = 'u32[144,128]{1,0:T(1,128)}', space=vmem, size = 0x12000, scoped, tag = 'internal scratch']
  %s0 = inlined_call_operand.vmem [shape: f32[2,2,1,256], index: 0, kind: input, shape index: {}]
  %s1 = inlined_call_operand.vmem [shape: f32[32,1], index: 1, kind: input, shape index: {}]
  %s2 = inlined_call_operand.vmem [shape: f32[32,1], index: 2, kind: input, shape index: {}]
  %s3 = inlined_call_operand.hbm [shape: f32[2,2,32,256], index: 3, kind: output, shape index: {}]
  %s4 = sld [smem:[#allocation0]]
  $region45: #{tpu_custom_call.1} parent=0
    _
  %s6 = ssub.s32 1, %s4
  %s7 = scalar_select 0, %s6, %s4
  $region1: #{tpu_custom_call.1} parent=0
    #allocation2 [shape = 'u8[65536]{0}', space=vmem, size = 0x10000, scoped, tag = 'output window, operand 0']
    #allocation3 [shape = 's32[2]{0}', space=sflag, size = 0x8, scoped, tag = 'scoped memory for tpu_custom_call.1']
    %8 = vsyncpa [#allocation3], 0
    %s9 = scalar_lea.sflag [#allocation3], 1
    %10 = vsyncpa %s9, 0
    loop: start=0, step=1, limit=6
    $region2: #{tpu_custom_call.1} parent=1 // loop_pre_header
      _
    $region3: #{tpu_custom_call.1} parent=1 // loop_header
      %s12 = sphi 0, %s16
      %p13 = scmp.ge.s32.totalorder %s12, 6
      %s19 = sphi 0, %s38
      %s20 = sphi 0, %s34
      %s21 = sphi 0, %s30
      %s22 = sphi 0, %s19
      %s23 = sphi 0, %s20
      %s24 = sphi 0, %s21
      %s25 = sphi 0, %s22
      %s26 = sphi 0, %s23
      %s27 = sphi 0, %s24
      %s45 = sphi 0, %s47
      %s48 = sphi 0, %s45
      %s49 = sphi 0, %s48
      %s65 = sphi 0, %s49
      %s69 = sphi 0, %s69
      %s71 = sphi 0, %s69
      %s72 = sphi 0, %s71
      %s86 = sphi 0, %s72
      %s90 = sphi 0, %s90
      %s92 = sphi 0, %s90
      %s93 = sphi 0, %s92
      %s107 = sphi 0, %s93
      %s117 = sphi 0, %s119
      %s120 = sphi 0, %s117
      %s121 = sphi 0, %s120
      %s137 = sphi 0, %s121
    $region4: #{tpu_custom_call.1} parent=1 // loop_header_branch
      %15 = sbr.rel (%p13) target = $region8
    $region5: #{tpu_custom_call.1} parent=1 // loop_body
      %s17 = ssub.s32 %s12, 1
      %s18 = ssub.s32 %s12, 2
      %s28 = sadd.s32 1, %s21
      %p29 = scmp.ge.s32.totalorder %s28, 1
      %s30 = scalar_select %p29, 0, %s28
      %s31 = sadd.s32 1, %s20
      %s32 = scalar_select %p29, %s31, %s20
      %p33 = scmp.ge.s32.totalorder %s32, 2
      %s34 = scalar_select %p33, 0, %s32
      %s35 = sadd.s32 1, %s19
      %s36 = scalar_select %p33, %s35, %s19
      %p37 = scmp.ge.s32.totalorder %s36, 2
      %s38 = scalar_select %p37, 0, %s36
      %s39 = ssub.s32 %s19, %s38
      %s40 = ssub.s32 %s20, %s34
      %s41 = sor.u32 %s39, %s40
      %s42 = ssub.s32 %s21, %s30
      %s43 = sor.u32 %s41, %s42
      %p44 = scmp.eq.s32.totalorder %s43, 0
      %s46 = sadd.s32 %s45, 1
      %s47 = scalar_select %p44, %s45, %s46
      %p50 = pneg %p44
      %p51 = scmp.eq.s32.totalorder %s12, 3
      %p52 = por %p50, %p51
      %p53 = scmp.ne.s32.totalorder %s45, %s48
      %p54 = scmp.eq.s32.totalorder %s12, 0
      %p55 = por %p53, %p54
      %p56 = scmp.ne.s32.totalorder %s45, %s48
      %p57 = scmp.eq.s32.totalorder %s17, 3
      %p58 = por %p56, %p57
      %p59 = scmp.ne.s32.totalorder %s48, %s49
      %p60 = scmp.eq.s32.totalorder %s17, 0
      %p61 = por %p59, %p60
      %p62 = scmp.ne.s32.totalorder %s48, %s49
      %p63 = scmp.eq.s32.totalorder %s18, 3
      %p64 = por %p62, %p63
      %p66 = scmp.ne.s32.totalorder %s49, %s65
      %p67 = scmp.eq.s32.totalorder %s18, 0
      %p68 = por %p66, %p67
      %s70 = sadd.s32 %s69, 1
      %p73 = scmp.eq.s32.totalorder %s12, 3
      %p74 = scmp.ne.s32.totalorder %s69, %s71
      %p75 = scmp.eq.s32.totalorder %s12, 0
      %p76 = por %p74, %p75
      %p77 = scmp.ne.s32.totalorder %s69, %s71
      %p78 = scmp.eq.s32.totalorder %s17, 3
      %p79 = por %p77, %p78
      %p80 = scmp.ne.s32.totalorder %s71, %s72
      %p81 = scmp.eq.s32.totalorder %s17, 0
      %p82 = por %p80, %p81
      %p83 = scmp.ne.s32.totalorder %s71, %s72
      %p84 = scmp.eq.s32.totalorder %s18, 3
      %p85 = por %p83, %p84
      %p87 = scmp.ne.s32.totalorder %s72, %s86
      %p88 = scmp.eq.s32.totalorder %s18, 0
      %p89 = por %p87, %p88
      %s91 = sadd.s32 %s90, 1
      %p94 = scmp.eq.s32.totalorder %s12, 3
      %p95 = scmp.ne.s32.totalorder %s90, %s92
      %p96 = scmp.eq.s32.totalorder %s12, 0
      %p97 = por %p95, %p96
      %p98 = scmp.ne.s32.totalorder %s90, %s92
      %p99 = scmp.eq.s32.totalorder %s17, 3
      %p100 = por %p98, %p99
      %p101 = scmp.ne.s32.totalorder %s92, %s93
      %p102 = scmp.eq.s32.totalorder %s17, 0
      %p103 = por %p101, %p102
      %p104 = scmp.ne.s32.totalorder %s92, %s93
      %p105 = scmp.eq.s32.totalorder %s18, 3
      %p106 = por %p104, %p105
      %p108 = scmp.ne.s32.totalorder %s93, %s107
      %p109 = scmp.eq.s32.totalorder %s18, 0
      %p110 = por %p108, %p109
      %s111 = ssub.s32 %s19, %s38
      %s112 = ssub.s32 %s20, %s34
      %s113 = sor.u32 %s111, %s112
      %s114 = ssub.s32 %s21, %s30
      %s115 = sor.u32 %s113, %s114
      %p116 = scmp.eq.s32.totalorder %s115, 0
      %s118 = sadd.s32 %s117, 1
      %s119 = scalar_select %p116, %s117, %s118
      %p122 = pneg %p116
      %p123 = scmp.eq.s32.totalorder %s12, 3
      %p124 = por %p122, %p123
      %p125 = scmp.ne.s32.totalorder %s117, %s120
      %p126 = scmp.eq.s32.totalorder %s12, 0
      %p127 = por %p125, %p126
      %p128 = scmp.ne.s32.totalorder %s117, %s120
      %p129 = scmp.eq.s32.totalorder %s17, 3
      %p130 = por %p128, %p129
      %p131 = scmp.ne.s32.totalorder %s120, %s121
      %p132 = scmp.eq.s32.totalorder %s17, 0
      %p133 = por %p131, %p132
      %p134 = scmp.ne.s32.totalorder %s120, %s121
      %p135 = scmp.eq.s32.totalorder %s18, 3
      %p136 = por %p134, %p135
      %p138 = scmp.ne.s32.totalorder %s121, %s137
      %p139 = scmp.eq.s32.totalorder %s18, 0
      %p140 = por %p138, %p139
      %p141 = scmp.le.s32.totalorder 1, %s12
      %p142 = scmp.lt.s32.totalorder %s12, 5
      %p143 = pnand %p141, %p142
      %p144 = pneg %p143
      // Predicated region
      $region9: #{tpu_custom_call.1} parent=5 // pred_check
        _
      $region10: #{tpu_custom_call.1} parent=5 // pred_check_branch
        %146 = sbr.rel (%p143) target = $region12
      $region11: #{tpu_custom_call.1} parent=5 // pred_region
        %s147 = ssub.s32 %s12, 1
        // Predicated region
        $region13: #{tpu_custom_call.1} parent=11 // pred_check
          %p148 = pneg %p82
        $region14: #{tpu_custom_call.1} parent=11 // pred_check_branch
          %150 = sbr.rel (%p148) target = $region16
        $region15: #{tpu_custom_call.1} parent=11 // pred_region
          _
        $region16: #{tpu_custom_call.1} parent=11 // pred_fallthru
          _
        // Predicated region
        $region17: #{tpu_custom_call.1} parent=11 // pred_check
          %p151 = pneg %p103
        $region18: #{tpu_custom_call.1} parent=11 // pred_check_branch
          %153 = sbr.rel (%p151) target = $region20
        $region19: #{tpu_custom_call.1} parent=11 // pred_region
          _
        $region20: #{tpu_custom_call.1} parent=11 // pred_fallthru
          _
      $region12: #{tpu_custom_call.1} parent=5 // pred_fallthru
        _
      %p154 = scmp.lt.s32.totalorder %s12, 4
      // Predicated region
      $region21: #{tpu_custom_call.1} parent=5 // pred_check
        %p155 = pneg %p154
      $region22: #{tpu_custom_call.1} parent=5 // pred_check_branch
        %157 = sbr.rel (%p155) target = $region24
      $region23: #{tpu_custom_call.1} parent=5 // pred_region
        // Predicated region
        $region25: #{tpu_custom_call.1} parent=23 // pred_check
          %p158 = pneg %p55
        $region26: #{tpu_custom_call.1} parent=23 // pred_check_branch
          %160 = sbr.rel (%p158) target = $region28
        $region27: #{tpu_custom_call.1} parent=23 // pred_region
          %s161 = smul.u32 2, %s21
          %p162 = scmp.lt.s32.totalorder %s19, 1
          %s163 = scalar_select %p162, %s19, 1
          %p164 = scmp.lt.s32.totalorder %s20, 1
          %s165 = scalar_select %p164, %s20, 1
          %p166 = scmp.lt.s32.totalorder %s161, 1
          %s167 = scalar_select %p166, %s161, 1
          %s168 = smul.addr %s165, 2
          %s169 = sadd.s32 %s167, %s168
          %s170 = smul.addr %s163, 4
          %s171 = sadd.s32 %s169, %s170
          %s172 = scalar_lea.vmem %s0, %s171
          %s173 = smul.u32 2, %s21
        $region28: #{tpu_custom_call.1} parent=23 // pred_fallthru
          _
      $region24: #{tpu_custom_call.1} parent=5 // pred_fallthru
        _
      %p174 = scmp.le.s32.totalorder 1, %s12
      %p175 = scmp.lt.s32.totalorder %s12, 5
      %p176 = pnand %p174, %p175
      %p177 = pneg %p176
      // Predicated region
      $region29: #{tpu_custom_call.1} parent=5 // pred_check
        _
      $region30: #{tpu_custom_call.1} parent=5 // pred_check_branch
        %179 = sbr.rel (%p176) target = $region32
      $region31: #{tpu_custom_call.1} parent=5 // pred_region
        %s180 = ssub.s32 %s12, 1
        %s181 = smul.u32 2, %s24
        %p182 = scmp.lt.s32.totalorder %s22, 1
        %s183 = scalar_select %p182, %s22, 1
        %p184 = scmp.lt.s32.totalorder %s23, 1
        %s185 = scalar_select %p184, %s23, 1
        %p186 = scmp.lt.s32.totalorder %s181, 1
        %s187 = scalar_select %p186, %s181, 1
        %s188 = smul.addr %s185, 2
        %s189 = sadd.s32 %s187, %s188
        %s190 = smul.addr %s183, 4
        %s191 = sadd.s32 %s189, %s190
        %s192 = scalar_lea.vmem %s0, %s191
        %p193 = pneg %p61
        %p194 = pneg %p58
        %p195 = pneg %p82
        %p196 = pneg %p79
        %p197 = pneg %p103
        %p198 = pneg %p100
        %p199 = pneg %p133
        %p200 = pneg %p130
        %s201 = sand.u32 %s120, 1
        %s202 = scalar_lea.sflag [#allocation3], %s201
        %s203 = sand.u32 %s120, 1
        %s204 = smul.addr %s203, 64
        %s205 = scalar_lea.vmem [#allocation2], %s204
        %s206 = smul.u32 2, %s24
        %p207 = scmp.lt.s32.totalorder %s22, 1
        %s208 = scalar_select %p207, %s22, 1
        %p209 = scmp.lt.s32.totalorder %s23, 1
        %s210 = scalar_select %p209, %s23, 1
        %p211 = scmp.lt.s32.totalorder %s206, 1
        %s212 = scalar_select %p211, %s206, 1
        %s213 = smul.addr %s210, 2
        %s214 = sadd.s32 %s212, %s213
        %s215 = smul.addr %s208, 4
        %s216 = sadd.s32 %s214, %s215
        %s217 = scalar_lea.vmem %s0, %s216
        %s218 = smul.u32 2, %s24
        %s219 = smul.u32 2, %s24
        %v220 = vld [vmem:[%s217] sm:$0x3]
        %v221 = vld [vmem:[%s1] sm:$0xff]
        %v222 = vld [vmem:[%s1 + $0x8] sm:$0xff]
        %v223 = vld [vmem:[%s1 + $0x10] sm:$0xff]
        %v224 = vld [vmem:[%s1 + $0x18] sm:$0xff]
        %v226 = vlaneseq
        %v227 = vshrl.u32 %v226, 7
        %v228 = vsub.s32 0, %v227
        %v229 = vrot.slane %v220, %v228
        %v230 = vlaneseq
        %v231 = vshrl.u32 %v230, 7
        %v232 = vsub.s32 1, %v231
        %v233 = vrot.slane %v220, %v232
        %237 = vset.pattern.permute.xlu0 0
        %238 = vperm.xlu0 %237, %v221
        %v239 = vpop.permute.xlu0 %238
        %242 = vset.pattern.permute.xlu0 0
        %243 = vperm.xlu0 %242, %v222
        %v244 = vpop.permute.xlu0 %243
        %247 = vset.pattern.permute.xlu0 0
        %248 = vperm.xlu0 %247, %v223
        %v249 = vpop.permute.xlu0 %248
        %252 = vset.pattern.permute.xlu0 0
        %253 = vperm.xlu0 %252, %v224
        %v254 = vpop.permute.xlu0 %253
        %v256 = vmul.f32 %v229, %v239
        %v257 = vmul.f32 %v233, %v239
        %v258 = vmul.f32 %v229, %v244
        %v259 = vmul.f32 %v233, %v244
        %v260 = vmul.f32 %v229, %v249
        %v261 = vmul.f32 %v233, %v249
        %v262 = vmul.f32 %v229, %v254
        %v263 = vmul.f32 %v233, %v254
        %v264 = vld [vmem:[%s2] sm:$0xff]
        %v265 = vld [vmem:[%s2 + $0x8] sm:$0xff]
        %v266 = vld [vmem:[%s2 + $0x10] sm:$0xff]
        %v267 = vld [vmem:[%s2 + $0x18] sm:$0xff]
        %269 = vset.pattern.permute.xlu0 0
        %270 = vperm.xlu0 %269, %v264
        %v271 = vpop.permute.xlu0 %270
        %274 = vset.pattern.permute.xlu0 0
        %275 = vperm.xlu0 %274, %v265
        %v276 = vpop.permute.xlu0 %275
        %279 = vset.pattern.permute.xlu0 0
        %280 = vperm.xlu0 %279, %v266
        %v281 = vpop.permute.xlu0 %280
        %284 = vset.pattern.permute.xlu0 0
        %285 = vperm.xlu0 %284, %v267
        %v286 = vpop.permute.xlu0 %285
        %v288 = vadd.f32 %v256, %v271
        %v289 = vadd.f32 %v257, %v271
        %v290 = vadd.f32 %v258, %v276
        %v291 = vadd.f32 %v259, %v276
        %v292 = vadd.f32 %v260, %v281
        %v293 = vadd.f32 %v261, %v281
        %v294 = vadd.f32 %v262, %v286
        %v295 = vadd.f32 %v263, %v286
        %v296 = vand.u32 2147483647, %v288
        %vm297 = vcmp.le.f32.partialorder %v296, 0.7853982
        %vm298 = vcmp.lt.s32.totalorder %v288, 0
        %v299 = vand.u32 %v288, 2139095040
        %v300 = vshrl.u32 %v299, 23
        %v301 = vsub.s32 %v300, 127
        %v302 = vand.u32 2147483647, %v288
        %v303 = vand.u32 %v302, 8388607
        %v304 = vor.u32 %v303, 8388608
        %v305 = vsub.s32 0, %v304
        %v306 = vadd.s32 %v301, 1
        %vm307 = vcmp.gt.s32.totalorder %v306, 0
        %v308 = vsel %vm307, %v306, 0
        %v309 = vshrl.u32 %v308, 5
        %v310 = vand.u32 %v308, 31
        %v311 = vsub.s32 32, %v310
        %v312 = vshrl.u32 683565275, %v311
        %v313 = vshll.u32 683565275, %v310
        %v314 = vshrl.u32 2475754826, %v311
        %v315 = vor.u32 %v313, %v314
        %v316 = vshll.u32 2475754826, %v310
        %v317 = vshrl.u32 2131351028, %v311
        %v318 = vor.u32 %v316, %v317
        %v319 = vshll.u32 2131351028, %v310
        %v320 = vshrl.u32 2102212464, %v311
        %v321 = vor.u32 %v319, %v320
        %v322 = vshll.u32 2102212464, %v310
        %v323 = vshrl.u32 920167782, %v311
        %v324 = vor.u32 %v322, %v323
        %v325 = vshll.u32 920167782, %v310
        %v326 = vshrl.u32 1326507024, %v311
        %v327 = vor.u32 %v325, %v326
        %vm328 = vcmp.lt.s32.totalorder %v309, 1
        %vm329 = vcmp.lt.s32.totalorder %v309, 2
        %vm330 = vcmp.lt.s32.totalorder %v309, 3
        %vm331 = vcmp.lt.s32.totalorder %v309, 4
        %v332 = vsel %vm328, %v312, %v315
        %v333 = vsel %vm331, %v321, 2102212464
        %v334 = vsel %vm330, %v318, %v333
        %v335 = vsel %vm329, %v332, %v334
        %v336 = vsel %vm328, %v315, %v318
        %v337 = vsel %vm331, %v324, 920167782
        %v338 = vsel %vm330, %v321, %v337
        %v339 = vsel %vm329, %v336, %v338
        %v340 = vsel %vm328, %v318, %v321
        %v341 = vsel %vm331, %v327, 1326507024
        %v342 = vsel %vm330, %v324, %v341
        %v343 = vsel %vm329, %v340, %v342
        %v344 = vshll.u32 %v304, 8
        %v345 = vmul.u32.u64.compose %v344, %v343
        %v346 = vextract.low.u32 %v345
        %v347 = vextract.high.u32 %v345
        %v348 = vmul.u32.u64.compose %v344, %v339
        %v349 = vextract.low.u32 %v348
        %v350 = vextract.high.u32 %v348
        %v351 = vmul.u32 %v344, %v335
        %v352 = vadd.s32 %v347, %v349
        %vm353 = vc.u32 %v347, %v349
        %v354 = vadd.s32 %v350, 1
        %v355 = vsel %vm353, %v354, %v350
        %v356 = vadd.s32 %v351, %v355
        %v357 = vadd.s32 %v356, 536870912
        %v358 = vshrl.u32 %v357, 30
        %v359 = vshll.u32 %v358, 30
        %v360 = vsub.s32 %v356, %v359
        %vm361 = vcmp.lt.s32.totalorder %v360, 0
        %v362 = vsub.s32 0, %v360
        %v363 = vsel %vm361, %v362, %v360
        %v364 = vclz %v363
        %v365 = vsub.s32 %v364, 2
        %vm366 = vcmp.gt.s32.totalorder 0, %v365
        %v367 = vsel %vm366, 0, %v365
        %v368 = vsub.s32 32, %v367
        %v369 = vshll.u32 %v360, %v367
        %v370 = vshrl.u32 %v352, %v368
        %v371 = vor.u32 %v369, %v370
        %v372 = vsub.s32 4294967266, %v367
        %v373 = vadd.s32 %v372, 127
        %v374 = vshll.u32 %v373, 23
        %v375 = vor.u32 4788187, %v374
        %v376 = vand.u32 2147483647, %v375
        %v378 = vcvt.s32.f32 %v371
        %v379 = vmul.f32 %v378, %v376
        %v380 = vxor.u32 %v379, 2147483648
        %v381 = vsel %vm298, %v380, %v379
        %v382 = vsub.s32 4, %v358
        %v383 = vsel %vm298, %v382, %v358
        %v384 = vsel %vm297, %v288, %v381
        %v385 = vsel %vm297, 0, %v383
        %v386 = vcosq.f32.pop %v384
        %v387 = vsinq.f32.pop %v384
        %vm388 = vweird.f32 %v288
        %v389 = vadd.s32 %v385, 3
        %v390 = vand.u32 %v389, 3
        %vm391 = vcmp.lt.s32.totalorder %v390, 2
        %vm392 = vcmp.eq.s32.totalorder %v390, 0
        %v393 = vxor.u32 %v387, 2147483648
        %v394 = vsel %vm392, %v386, %v393
        %vm395 = vcmp.eq.s32.totalorder %v390, 2
        %v396 = vxor.u32 %v386, 2147483648
        %v397 = vsel %vm395, %v396, %v387
        %v398 = vsel %vm391, %v394, %v397
        %v399 = vsel %vm388, nan, %v398
        %v400 = vand.u32 2147483647, %v289
        %vm401 = vcmp.le.f32.partialorder %v400, 0.7853982
        %vm402 = vcmp.lt.s32.totalorder %v289, 0
        %v403 = vand.u32 %v289, 2139095040
        %v404 = vshrl.u32 %v403, 23
        %v405 = vsub.s32 %v404, 127
        %v406 = vand.u32 2147483647, %v289
        %v407 = vand.u32 %v406, 8388607
        %v408 = vor.u32 %v407, 8388608
        %v409 = vsub.s32 0, %v408
        %v410 = vadd.s32 %v405, 1
        %vm411 = vcmp.gt.s32.totalorder %v410, 0
        %v412 = vsel %vm411, %v410, 0
        %v413 = vshrl.u32 %v412, 5
        %v414 = vand.u32 %v412, 31
        %v415 = vsub.s32 32, %v414
        %v416 = vshrl.u32 683565275, %v415
        %v417 = vshll.u32 683565275, %v414
        %v418 = vshrl.u32 2475754826, %v415
        %v419 = vor.u32 %v417, %v418
        %v420 = vshll.u32 2475754826, %v414
        %v421 = vshrl.u32 2131351028, %v415
        %v422 = vor.u32 %v420, %v421
        %v423 = vshll.u32 2131351028, %v414
        %v424 = vshrl.u32 2102212464, %v415
        %v425 = vor.u32 %v423, %v424
        %v426 = vshll.u32 2102212464, %v414
        %v427 = vshrl.u32 920167782, %v415
        %v428 = vor.u32 %v426, %v427
        %v429 = vshll.u32 920167782, %v414
        %v430 = vshrl.u32 1326507024, %v415
        %v431 = vor.u32 %v429, %v430
        %vm432 = vcmp.lt.s32.totalorder %v413, 1
        %vm433 = vcmp.lt.s32.totalorder %v413, 2
        %vm434 = vcmp.lt.s32.totalorder %v413, 3
        %vm435 = vcmp.lt.s32.totalorder %v413, 4
        %v436 = vsel %vm432, %v416, %v419
        %v437 = vsel %vm435, %v425, 2102212464
        %v438 = vsel %vm434, %v422, %v437
        %v439 = vsel %vm433, %v436, %v438
        %v440 = vsel %vm432, %v419, %v422
        %v441 = vsel %vm435, %v428, 920167782
        %v442 = vsel %vm434, %v425, %v441
        %v443 = vsel %vm433, %v440, %v442
        %v444 = vsel %vm432, %v422, %v425
        %v445 = vsel %vm435, %v431, 1326507024
        %v446 = vsel %vm434, %v428, %v445
        %v447 = vsel %vm433, %v444, %v446
        %v448 = vshll.u32 %v408, 8
        %v449 = vmul.u32.u64.compose %v448, %v447
        %v450 = vextract.low.u32 %v449
        %v451 = vextract.high.u32 %v449
        %v452 = vmul.u32.u64.compose %v448, %v443
        %v453 = vextract.low.u32 %v452
        %v454 = vextract.high.u32 %v452
        %v455 = vmul.u32 %v448, %v439
        %v456 = vadd.s32 %v451, %v453
        %vm457 = vc.u32 %v451, %v453
        %v458 = vadd.s32 %v454, 1
        %v459 = vsel %vm457, %v458, %v454
        %v460 = vadd.s32 %v455, %v459
        %v461 = vadd.s32 %v460, 536870912
        %v462 = vshrl.u32 %v461, 30
        %v463 = vshll.u32 %v462, 30
        %v464 = vsub.s32 %v460, %v463
        %vm465 = vcmp.lt.s32.totalorder %v464, 0
        %v466 = vsub.s32 0, %v464
        %v467 = vsel %vm465, %v466, %v464
        %v468 = vclz %v467
        %v469 = vsub.s32 %v468, 2
        %vm470 = vcmp.gt.s32.totalorder 0, %v469
        %v471 = vsel %vm470, 0, %v469
        %v472 = vsub.s32 32, %v471
        %v473 = vshll.u32 %v464, %v471
        %v474 = vshrl.u32 %v456, %v472
        %v475 = vor.u32 %v473, %v474
        %v476 = vsub.s32 4294967266, %v471
        %v477 = vadd.s32 %v476, 127
        %v478 = vshll.u32 %v477, 23
        %v479 = vor.u32 4788187, %v478
        %v480 = vand.u32 2147483647, %v479
        %v482 = vcvt.s32.f32 %v475
        %v483 = vmul.f32 %v482, %v480
        %v484 = vxor.u32 %v483, 2147483648
        %v485 = vsel %vm402, %v484, %v483
        %v486 = vsub.s32 4, %v462
        %v487 = vsel %vm402, %v486, %v462
        %v488 = vsel %vm401, %v289, %v485
        %v489 = vsel %vm401, 0, %v487
        %v490 = vcosq.f32.pop %v488
        %v491 = vsinq.f32.pop %v488
        %vm492 = vweird.f32 %v289
        %v493 = vadd.s32 %v489, 3
        %v494 = vand.u32 %v493, 3
        %vm495 = vcmp.lt.s32.totalorder %v494, 2
        %vm496 = vcmp.eq.s32.totalorder %v494, 0
        %v497 = vxor.u32 %v491, 2147483648
        %v498 = vsel %vm496, %v490, %v497
        %vm499 = vcmp.eq.s32.totalorder %v494, 2
        %v500 = vxor.u32 %v490, 2147483648
        %v501 = vsel %vm499, %v500, %v491
        %v502 = vsel %vm495, %v498, %v501
        %v503 = vsel %vm492, nan, %v502
        %v504 = vand.u32 2147483647, %v290
        %vm505 = vcmp.le.f32.partialorder %v504, 0.7853982
        %vm506 = vcmp.lt.s32.totalorder %v290, 0
        %v507 = vand.u32 %v290, 2139095040
        %v508 = vshrl.u32 %v507, 23
        %v509 = vsub.s32 %v508, 127
        %v510 = vand.u32 2147483647, %v290
        %v511 = vand.u32 %v510, 8388607
        %v512 = vor.u32 %v511, 8388608
        %v513 = vsub.s32 0, %v512
        %v514 = vadd.s32 %v509, 1
        %vm515 = vcmp.gt.s32.totalorder %v514, 0
        %v516 = vsel %vm515, %v514, 0
        %v517 = vshrl.u32 %v516, 5
        %v518 = vand.u32 %v516, 31
        %v519 = vsub.s32 32, %v518
        %v520 = vshrl.u32 683565275, %v519
        %v521 = vshll.u32 683565275, %v518
        %v522 = vshrl.u32 2475754826, %v519
        %v523 = vor.u32 %v521, %v522
        %v524 = vshll.u32 2475754826, %v518
        %v525 = vshrl.u32 2131351028, %v519
        %v526 = vor.u32 %v524, %v525
        %v527 = vshll.u32 2131351028, %v518
        %v528 = vshrl.u32 2102212464, %v519
        %v529 = vor.u32 %v527, %v528
        %v530 = vshll.u32 2102212464, %v518
        %v531 = vshrl.u32 920167782, %v519
        %v532 = vor.u32 %v530, %v531
        %v533 = vshll.u32 920167782, %v518
        %v534 = vshrl.u32 1326507024, %v519
        %v535 = vor.u32 %v533, %v534
        %vm536 = vcmp.lt.s32.totalorder %v517, 1
        %vm537 = vcmp.lt.s32.totalorder %v517, 2
        %vm538 = vcmp.lt.s32.totalorder %v517, 3
        %vm539 = vcmp.lt.s32.totalorder %v517, 4
        %v540 = vsel %vm536, %v520, %v523
        %v541 = vsel %vm539, %v529, 2102212464
        %v542 = vsel %vm538, %v526, %v541
        %v543 = vsel %vm537, %v540, %v542
        %v544 = vsel %vm536, %v523, %v526
        %v545 = vsel %vm539, %v532, 920167782
        %v546 = vsel %vm538, %v529, %v545
        %v547 = vsel %vm537, %v544, %v546
        %v548 = vsel %vm536, %v526, %v529
        %v549 = vsel %vm539, %v535, 1326507024
        %v550 = vsel %vm538, %v532, %v549
        %v551 = vsel %vm537, %v548, %v550
        %v552 = vshll.u32 %v512, 8
        %v553 = vmul.u32.u64.compose %v552, %v551
        %v554 = vextract.low.u32 %v553
        %v555 = vextract.high.u32 %v553
        %v556 = vmul.u32.u64.compose %v552, %v547
        %v557 = vextract.low.u32 %v556
        %v558 = vextract.high.u32 %v556
        %v559 = vmul.u32 %v552, %v543
        %v560 = vadd.s32 %v555, %v557
        %vm561 = vc.u32 %v555, %v557
        %v562 = vadd.s32 %v558, 1
        %v563 = vsel %vm561, %v562, %v558
        %v564 = vadd.s32 %v559, %v563
        %v565 = vadd.s32 %v564, 536870912
        %v566 = vshrl.u32 %v565, 30
        %v567 = vshll.u32 %v566, 30
        %v568 = vsub.s32 %v564, %v567
        %vm569 = vcmp.lt.s32.totalorder %v568, 0
        %v570 = vsub.s32 0, %v568
        %v571 = vsel %vm569, %v570, %v568
        %v572 = vclz %v571
        %v573 = vsub.s32 %v572, 2
        %vm574 = vcmp.gt.s32.totalorder 0, %v573
        %v575 = vsel %vm574, 0, %v573
        %v576 = vsub.s32 32, %v575
        %v577 = vshll.u32 %v568, %v575
        %v578 = vshrl.u32 %v560, %v576
        %v579 = vor.u32 %v577, %v578
        %v580 = vsub.s32 4294967266, %v575
        %v581 = vadd.s32 %v580, 127
        %v582 = vshll.u32 %v581, 23
        %v583 = vor.u32 4788187, %v582
        %v584 = vand.u32 2147483647, %v583
        %v586 = vcvt.s32.f32 %v579
        %v587 = vmul.f32 %v586, %v584
        %v588 = vxor.u32 %v587, 2147483648
        %v589 = vsel %vm506, %v588, %v587
        %v590 = vsub.s32 4, %v566
        %v591 = vsel %vm506, %v590, %v566
        %v592 = vsel %vm505, %v290, %v589
        %v593 = vsel %vm505, 0, %v591
        %v594 = vcosq.f32.pop %v592
        %v595 = vsinq.f32.pop %v592
        %vm596 = vweird.f32 %v290
        %v597 = vadd.s32 %v593, 3
        %v598 = vand.u32 %v597, 3
        %vm599 = vcmp.lt.s32.totalorder %v598, 2
        %vm600 = vcmp.eq.s32.totalorder %v598, 0
        %v601 = vxor.u32 %v595, 2147483648
        %v602 = vsel %vm600, %v594, %v601
        %vm603 = vcmp.eq.s32.totalorder %v598, 2
        %v604 = vxor.u32 %v594, 2147483648
        %v605 = vsel %vm603, %v604, %v595
        %v606 = vsel %vm599, %v602, %v605
        %v607 = vsel %vm596, nan, %v606
        %v608 = vand.u32 2147483647, %v291
        %vm609 = vcmp.le.f32.partialorder %v608, 0.7853982
        %vm610 = vcmp.lt.s32.totalorder %v291, 0
        %v611 = vand.u32 %v291, 2139095040
        %v612 = vshrl.u32 %v611, 23
        %v613 = vsub.s32 %v612, 127
        %v614 = vand.u32 2147483647, %v291
        %v615 = vand.u32 %v614, 8388607
        %v616 = vor.u32 %v615, 8388608
        %v617 = vsub.s32 0, %v616
        %v618 = vadd.s32 %v613, 1
        %vm619 = vcmp.gt.s32.totalorder %v618, 0
        %v620 = vsel %vm619, %v618, 0
        %v621 = vshrl.u32 %v620, 5
        %v622 = vand.u32 %v620, 31
        %v623 = vsub.s32 32, %v622
        %v624 = vshrl.u32 683565275, %v623
        %v625 = vshll.u32 683565275, %v622
        %v626 = vshrl.u32 2475754826, %v623
        %v627 = vor.u32 %v625, %v626
        %v628 = vshll.u32 2475754826, %v622
        %v629 = vshrl.u32 2131351028, %v623
        %v630 = vor.u32 %v628, %v629
        %v631 = vshll.u32 2131351028, %v622
        %v632 = vshrl.u32 2102212464, %v623
        %v633 = vor.u32 %v631, %v632
        %v634 = vshll.u32 2102212464, %v622
        %v635 = vshrl.u32 920167782, %v623
        %v636 = vor.u32 %v634, %v635
        %v637 = vshll.u32 920167782, %v622
        %v638 = vshrl.u32 1326507024, %v623
        %v639 = vor.u32 %v637, %v638
        %vm640 = vcmp.lt.s32.totalorder %v621, 1
        %vm641 = vcmp.lt.s32.totalorder %v621, 2
        %vm642 = vcmp.lt.s32.totalorder %v621, 3
        %vm643 = vcmp.lt.s32.totalorder %v621, 4
        %v644 = vsel %vm640, %v624, %v627
        %v645 = vsel %vm643, %v633, 2102212464
        %v646 = vsel %vm642, %v630, %v645
        %v647 = vsel %vm641, %v644, %v646
        %v648 = vsel %vm640, %v627, %v630
        %v649 = vsel %vm643, %v636, 920167782
        %v650 = vsel %vm642, %v633, %v649
        %v651 = vsel %vm641, %v648, %v650
        %v652 = vsel %vm640, %v630, %v633
        %v653 = vsel %vm643, %v639, 1326507024
        %v654 = vsel %vm642, %v636, %v653
        %v655 = vsel %vm641, %v652, %v654
        %v656 = vshll.u32 %v616, 8
        %v657 = vmul.u32.u64.compose %v656, %v655
        %v658 = vextract.low.u32 %v657
        %v659 = vextract.high.u32 %v657
        %v660 = vmul.u32.u64.compose %v656, %v651
        %v661 = vextract.low.u32 %v660
        %v662 = vextract.high.u32 %v660
        %v663 = vmul.u32 %v656, %v647
        %v664 = vadd.s32 %v659, %v661
        %vm665 = vc.u32 %v659, %v661
        %v666 = vadd.s32 %v662, 1
        %v667 = vsel %vm665, %v666, %v662
        %v668 = vadd.s32 %v663, %v667
        %v669 = vadd.s32 %v668, 536870912
        %v670 = vshrl.u32 %v669, 30
        %v671 = vshll.u32 %v670, 30
        %v672 = vsub.s32 %v668, %v671
        %vm673 = vcmp.lt.s32.totalorder %v672, 0
        %v674 = vsub.s32 0, %v672
        %v675 = vsel %vm673, %v674, %v672
        %v676 = vclz %v675
        %v677 = vsub.s32 %v676, 2
        %vm678 = vcmp.gt.s32.totalorder 0, %v677
        %v679 = vsel %vm678, 0, %v677
        %v680 = vsub.s32 32, %v679
        %v681 = vshll.u32 %v672, %v679
        %v682 = vshrl.u32 %v664, %v680
        %v683 = vor.u32 %v681, %v682
        %v684 = vsub.s32 4294967266, %v679
        %v685 = vadd.s32 %v684, 127
        %v686 = vshll.u32 %v685, 23
        %v687 = vor.u32 4788187, %v686
        %v688 = vand.u32 2147483647, %v687
        %v690 = vcvt.s32.f32 %v683
        %v691 = vmul.f32 %v690, %v688
        %v692 = vxor.u32 %v691, 2147483648
        %v693 = vsel %vm610, %v692, %v691
        %v694 = vsub.s32 4, %v670
        %v695 = vsel %vm610, %v694, %v670
        %v696 = vsel %vm609, %v291, %v693
        %v697 = vsel %vm609, 0, %v695
        %v698 = vcosq.f32.pop %v696
        %v699 = vsinq.f32.pop %v696
        %vm700 = vweird.f32 %v291
        %v701 = vadd.s32 %v697, 3
        %v702 = vand.u32 %v701, 3
        %vm703 = vcmp.lt.s32.totalorder %v702, 2
        %vm704 = vcmp.eq.s32.totalorder %v702, 0
        %v705 = vxor.u32 %v699, 2147483648
        %v706 = vsel %vm704, %v698, %v705
        %vm707 = vcmp.eq.s32.totalorder %v702, 2
        %v708 = vxor.u32 %v698, 2147483648
        %v709 = vsel %vm707, %v708, %v699
        %v710 = vsel %vm703, %v706, %v709
        %v711 = vsel %vm700, nan, %v710
        %v712 = vand.u32 2147483647, %v292
        %vm713 = vcmp.le.f32.partialorder %v712, 0.7853982
        %vm714 = vcmp.lt.s32.totalorder %v292, 0
        %v715 = vand.u32 %v292, 2139095040
        %v716 = vshrl.u32 %v715, 23
        %v717 = vsub.s32 %v716, 127
        %v718 = vand.u32 2147483647, %v292
        %v719 = vand.u32 %v718, 8388607
        %v720 = vor.u32 %v719, 8388608
        %v721 = vsub.s32 0, %v720
        %v722 = vadd.s32 %v717, 1
        %vm723 = vcmp.gt.s32.totalorder %v722, 0
        %v724 = vsel %vm723, %v722, 0
        %v725 = vshrl.u32 %v724, 5
        %v726 = vand.u32 %v724, 31
        %v727 = vsub.s32 32, %v726
        %v728 = vshrl.u32 683565275, %v727
        %v729 = vshll.u32 683565275, %v726
        %v730 = vshrl.u32 2475754826, %v727
        %v731 = vor.u32 %v729, %v730
        %v732 = vshll.u32 2475754826, %v726
        %v733 = vshrl.u32 2131351028, %v727
        %v734 = vor.u32 %v732, %v733
        %v735 = vshll.u32 2131351028, %v726
        %v736 = vshrl.u32 2102212464, %v727
        %v737 = vor.u32 %v735, %v736
        %v738 = vshll.u32 2102212464, %v726
        %v739 = vshrl.u32 920167782, %v727
        %v740 = vor.u32 %v738, %v739
        %v741 = vshll.u32 920167782, %v726
        %v742 = vshrl.u32 1326507024, %v727
        %v743 = vor.u32 %v741, %v742
        %vm744 = vcmp.lt.s32.totalorder %v725, 1
        %vm745 = vcmp.lt.s32.totalorder %v725, 2
        %vm746 = vcmp.lt.s32.totalorder %v725, 3
        %vm747 = vcmp.lt.s32.totalorder %v725, 4
        %v748 = vsel %vm744, %v728, %v731
        %v749 = vsel %vm747, %v737, 2102212464
        %v750 = vsel %vm746, %v734, %v749
        %v751 = vsel %vm745, %v748, %v750
        %v752 = vsel %vm744, %v731, %v734
        %v753 = vsel %vm747, %v740, 920167782
        %v754 = vsel %vm746, %v737, %v753
        %v755 = vsel %vm745, %v752, %v754
        %v756 = vsel %vm744, %v734, %v737
        %v757 = vsel %vm747, %v743, 1326507024
        %v758 = vsel %vm746, %v740, %v757
        %v759 = vsel %vm745, %v756, %v758
        %v760 = vshll.u32 %v720, 8
        %v761 = vmul.u32.u64.compose %v760, %v759
        %v762 = vextract.low.u32 %v761
        %v763 = vextract.high.u32 %v761
        %v764 = vmul.u32.u64.compose %v760, %v755
        %v765 = vextract.low.u32 %v764
        %v766 = vextract.high.u32 %v764
        %v767 = vmul.u32 %v760, %v751
        %v768 = vadd.s32 %v763, %v765
        %vm769 = vc.u32 %v763, %v765
        %v770 = vadd.s32 %v766, 1
        %v771 = vsel %vm769, %v770, %v766
        %v772 = vadd.s32 %v767, %v771
        %v773 = vadd.s32 %v772, 536870912
        %v774 = vshrl.u32 %v773, 30
        %v775 = vshll.u32 %v774, 30
        %v776 = vsub.s32 %v772, %v775
        %vm777 = vcmp.lt.s32.totalorder %v776, 0
        %v778 = vsub.s32 0, %v776
        %v779 = vsel %vm777, %v778, %v776
        %v780 = vclz %v779
        %v781 = vsub.s32 %v780, 2
        %vm782 = vcmp.gt.s32.totalorder 0, %v781
        %v783 = vsel %vm782, 0, %v781
        %v784 = vsub.s32 32, %v783
        %v785 = vshll.u32 %v776, %v783
        %v786 = vshrl.u32 %v768, %v784
        %v787 = vor.u32 %v785, %v786
        %v788 = vsub.s32 4294967266, %v783
        %v789 = vadd.s32 %v788, 127
        %v790 = vshll.u32 %v789, 23
        %v791 = vor.u32 4788187, %v790
        %v792 = vand.u32 2147483647, %v791
        %v794 = vcvt.s32.f32 %v787
        %v795 = vmul.f32 %v794, %v792
        %v796 = vxor.u32 %v795, 2147483648
        %v797 = vsel %vm714, %v796, %v795
        %v798 = vsub.s32 4, %v774
        %v799 = vsel %vm714, %v798, %v774
        %v800 = vsel %vm713, %v292, %v797
        %v801 = vsel %vm713, 0, %v799
        %v802 = vcosq.f32.pop %v800
        %v803 = vsinq.f32.pop %v800
        %vm804 = vweird.f32 %v292
        %v805 = vadd.s32 %v801, 3
        %v806 = vand.u32 %v805, 3
        %vm807 = vcmp.lt.s32.totalorder %v806, 2
        %vm808 = vcmp.eq.s32.totalorder %v806, 0
        %v809 = vxor.u32 %v803, 2147483648
        %v810 = vsel %vm808, %v802, %v809
        %vm811 = vcmp.eq.s32.totalorder %v806, 2
        %v812 = vxor.u32 %v802, 2147483648
        %v813 = vsel %vm811, %v812, %v803
        %v814 = vsel %vm807, %v810, %v813
        %v815 = vsel %vm804, nan, %v814
        %v816 = vand.u32 2147483647, %v293
        %vm817 = vcmp.le.f32.partialorder %v816, 0.7853982
        %vm818 = vcmp.lt.s32.totalorder %v293, 0
        %v819 = vand.u32 %v293, 2139095040
        %v820 = vshrl.u32 %v819, 23
        %v821 = vsub.s32 %v820, 127
        %v822 = vand.u32 2147483647, %v293
        %v823 = vand.u32 %v822, 8388607
        %v824 = vor.u32 %v823, 8388608
        %v825 = vsub.s32 0, %v824
        %v826 = vadd.s32 %v821, 1
        %vm827 = vcmp.gt.s32.totalorder %v826, 0
        %v828 = vsel %vm827, %v826, 0
        %v829 = vshrl.u32 %v828, 5
        %v830 = vand.u32 %v828, 31
        %v831 = vsub.s32 32, %v830
        %v832 = vshrl.u32 683565275, %v831
        %v833 = vshll.u32 683565275, %v830
        %v834 = vshrl.u32 2475754826, %v831
        %v835 = vor.u32 %v833, %v834
        %v836 = vshll.u32 2475754826, %v830
        %v837 = vshrl.u32 2131351028, %v831
        %v838 = vor.u32 %v836, %v837
        %v839 = vshll.u32 2131351028, %v830
        %v840 = vshrl.u32 2102212464, %v831
        %v841 = vor.u32 %v839, %v840
        %v842 = vshll.u32 2102212464, %v830
        %v843 = vshrl.u32 920167782, %v831
        %v844 = vor.u32 %v842, %v843
        %v845 = vshll.u32 920167782, %v830
        %v846 = vshrl.u32 1326507024, %v831
        %v847 = vor.u32 %v845, %v846
        %vm848 = vcmp.lt.s32.totalorder %v829, 1
        %vm849 = vcmp.lt.s32.totalorder %v829, 2
        %vm850 = vcmp.lt.s32.totalorder %v829, 3
        %vm851 = vcmp.lt.s32.totalorder %v829, 4
        %v852 = vsel %vm848, %v832, %v835
        %v853 = vsel %vm851, %v841, 2102212464
        %v854 = vsel %vm850, %v838, %v853
        %v855 = vsel %vm849, %v852, %v854
        %v856 = vsel %vm848, %v835, %v838
        %v857 = vsel %vm851, %v844, 920167782
        %v858 = vsel %vm850, %v841, %v857
        %v859 = vsel %vm849, %v856, %v858
        %v860 = vsel %vm848, %v838, %v841
        %v861 = vsel %vm851, %v847, 1326507024
        %v862 = vsel %vm850, %v844, %v861
        %v863 = vsel %vm849, %v860, %v862
        %v864 = vshll.u32 %v824, 8
        %v865 = vmul.u32.u64.compose %v864, %v863
        %v866 = vextract.low.u32 %v865
        %v867 = vextract.high.u32 %v865
        %v868 = vmul.u32.u64.compose %v864, %v859
        %v869 = vextract.low.u32 %v868
        %v870 = vextract.high.u32 %v868
        %v871 = vmul.u32 %v864, %v855
        %v872 = vadd.s32 %v867, %v869
        %vm873 = vc.u32 %v867, %v869
        %v874 = vadd.s32 %v870, 1
        %v875 = vsel %vm873, %v874, %v870
        %v876 = vadd.s32 %v871, %v875
        %v877 = vadd.s32 %v876, 536870912
        %v878 = vshrl.u32 %v877, 30
        %v879 = vshll.u32 %v878, 30
        %v880 = vsub.s32 %v876, %v879
        %vm881 = vcmp.lt.s32.totalorder %v880, 0
        %v882 = vsub.s32 0, %v880
        %v883 = vsel %vm881, %v882, %v880
        %v884 = vclz %v883
        %v885 = vsub.s32 %v884, 2
        %vm886 = vcmp.gt.s32.totalorder 0, %v885
        %v887 = vsel %vm886, 0, %v885
        %v888 = vsub.s32 32, %v887
        %v889 = vshll.u32 %v880, %v887
        %v890 = vshrl.u32 %v872, %v888
        %v891 = vor.u32 %v889, %v890
        %v892 = vsub.s32 4294967266, %v887
        %v893 = vadd.s32 %v892, 127
        %v894 = vshll.u32 %v893, 23
        %v895 = vor.u32 4788187, %v894
        %v896 = vand.u32 2147483647, %v895
        %v898 = vcvt.s32.f32 %v891
        %v899 = vmul.f32 %v898, %v896
        %v900 = vxor.u32 %v899, 2147483648
        %v901 = vsel %vm818, %v900, %v899
        %v902 = vsub.s32 4, %v878
        %v903 = vsel %vm818, %v902, %v878
        %v904 = vsel %vm817, %v293, %v901
        %v905 = vsel %vm817, 0, %v903
        %v906 = vcosq.f32.pop %v904
        %v907 = vsinq.f32.pop %v904
        %vm908 = vweird.f32 %v293
        %v909 = vadd.s32 %v905, 3
        %v910 = vand.u32 %v909, 3
        %vm911 = vcmp.lt.s32.totalorder %v910, 2
        %vm912 = vcmp.eq.s32.totalorder %v910, 0
        %v913 = vxor.u32 %v907, 2147483648
        %v914 = vsel %vm912, %v906, %v913
        %vm915 = vcmp.eq.s32.totalorder %v910, 2
        %v916 = vxor.u32 %v906, 2147483648
        %v917 = vsel %vm915, %v916, %v907
        %v918 = vsel %vm911, %v914, %v917
        %v919 = vsel %vm908, nan, %v918
        %v920 = vand.u32 2147483647, %v294
        %vm921 = vcmp.le.f32.partialorder %v920, 0.7853982
        %vm922 = vcmp.lt.s32.totalorder %v294, 0
        %v923 = vand.u32 %v294, 2139095040
        %v924 = vshrl.u32 %v923, 23
        %v925 = vsub.s32 %v924, 127
        %v926 = vand.u32 2147483647, %v294
        %v927 = vand.u32 %v926, 8388607
        %v928 = vor.u32 %v927, 8388608
        %v929 = vsub.s32 0, %v928
        %v930 = vadd.s32 %v925, 1
        %vm931 = vcmp.gt.s32.totalorder %v930, 0
        %v932 = vsel %vm931, %v930, 0
        %v933 = vshrl.u32 %v932, 5
        %v934 = vand.u32 %v932, 31
        %v935 = vsub.s32 32, %v934
        %v936 = vshrl.u32 683565275, %v935
        %v937 = vshll.u32 683565275, %v934
        %v938 = vshrl.u32 2475754826, %v935
        %v939 = vor.u32 %v937, %v938
        %v940 = vshll.u32 2475754826, %v934
        %v941 = vshrl.u32 2131351028, %v935
        %v942 = vor.u32 %v940, %v941
        %v943 = vshll.u32 2131351028, %v934
        %v944 = vshrl.u32 2102212464, %v935
        %v945 = vor.u32 %v943, %v944
        %v946 = vshll.u32 2102212464, %v934
        %v947 = vshrl.u32 920167782, %v935
        %v948 = vor.u32 %v946, %v947
        %v949 = vshll.u32 920167782, %v934
        %v950 = vshrl.u32 1326507024, %v935
        %v951 = vor.u32 %v949, %v950
        %vm952 = vcmp.lt.s32.totalorder %v933, 1
        %vm953 = vcmp.lt.s32.totalorder %v933, 2
        %vm954 = vcmp.lt.s32.totalorder %v933, 3
        %vm955 = vcmp.lt.s32.totalorder %v933, 4
        %v956 = vsel %vm952, %v936, %v939
        %v957 = vsel %vm955, %v945, 2102212464
        %v958 = vsel %vm954, %v942, %v957
        %v959 = vsel %vm953, %v956, %v958
        %v960 = vsel %vm952, %v939, %v942
        %v961 = vsel %vm955, %v948, 920167782
        %v962 = vsel %vm954, %v945, %v961
        %v963 = vsel %vm953, %v960, %v962
        %v964 = vsel %vm952, %v942, %v945
        %v965 = vsel %vm955, %v951, 1326507024
        %v966 = vsel %vm954, %v948, %v965
        %v967 = vsel %vm953, %v964, %v966
        %v968 = vshll.u32 %v928, 8
        %v969 = vmul.u32.u64.compose %v968, %v967
        %v970 = vextract.low.u32 %v969
        %v971 = vextract.high.u32 %v969
        %v972 = vmul.u32.u64.compose %v968, %v963
        %v973 = vextract.low.u32 %v972
        %v974 = vextract.high.u32 %v972
        %v975 = vmul.u32 %v968, %v959
        %v976 = vadd.s32 %v971, %v973
        %vm977 = vc.u32 %v971, %v973
        %v978 = vadd.s32 %v974, 1
        %v979 = vsel %vm977, %v978, %v974
        %v980 = vadd.s32 %v975, %v979
        %v981 = vadd.s32 %v980, 536870912
        %v982 = vshrl.u32 %v981, 30
        %v983 = vshll.u32 %v982, 30
        %v984 = vsub.s32 %v980, %v983
        %vm985 = vcmp.lt.s32.totalorder %v984, 0
        %v986 = vsub.s32 0, %v984
        %v987 = vsel %vm985, %v986, %v984
        %v988 = vclz %v987
        %v989 = vsub.s32 %v988, 2
        %vm990 = vcmp.gt.s32.totalorder 0, %v989
        %v991 = vsel %vm990, 0, %v989
        %v992 = vsub.s32 32, %v991
        %v993 = vshll.u32 %v984, %v991
        %v994 = vshrl.u32 %v976, %v992
        %v995 = vor.u32 %v993, %v994
        %v996 = vsub.s32 4294967266, %v991
        %v997 = vadd.s32 %v996, 127
        %v998 = vshll.u32 %v997, 23
        %v999 = vor.u32 4788187, %v998
        %v1000 = vand.u32 2147483647, %v999
        %v1002 = vcvt.s32.f32 %v995
        %v1003 = vmul.f32 %v1002, %v1000
        %v1004 = vxor.u32 %v1003, 2147483648
        %v1005 = vsel %vm922, %v1004, %v1003
        %v1006 = vsub.s32 4, %v982
        %v1007 = vsel %vm922, %v1006, %v982
        %v1008 = vsel %vm921, %v294, %v1005
        %v1009 = vsel %vm921, 0, %v1007
        %v1010 = vcosq.f32.pop %v1008
        %v1011 = vsinq.f32.pop %v1008
        %vm1012 = vweird.f32 %v294
        %v1013 = vadd.s32 %v1009, 3
        %v1014 = vand.u32 %v1013, 3
        %vm1015 = vcmp.lt.s32.totalorder %v1014, 2
        %vm1016 = vcmp.eq.s32.totalorder %v1014, 0
        %v1017 = vxor.u32 %v1011, 2147483648
        %v1018 = vsel %vm1016, %v1010, %v1017
        %vm1019 = vcmp.eq.s32.totalorder %v1014, 2
        %v1020 = vxor.u32 %v1010, 2147483648
        %v1021 = vsel %vm1019, %v1020, %v1011
        %v1022 = vsel %vm1015, %v1018, %v1021
        %v1023 = vsel %vm1012, nan, %v1022
        %v1024 = vand.u32 2147483647, %v295
        %vm1025 = vcmp.le.f32.partialorder %v1024, 0.7853982
        %vm1026 = vcmp.lt.s32.totalorder %v295, 0
        %v1027 = vand.u32 %v295, 2139095040
        %v1028 = vshrl.u32 %v1027, 23
        %v1029 = vsub.s32 %v1028, 127
        %v1030 = vand.u32 2147483647, %v295
        %v1031 = vand.u32 %v1030, 8388607
        %v1032 = vor.u32 %v1031, 8388608
        %v1033 = vsub.s32 0, %v1032
        %v1034 = vadd.s32 %v1029, 1
        %vm1035 = vcmp.gt.s32.totalorder %v1034, 0
        %v1036 = vsel %vm1035, %v1034, 0
        %v1037 = vshrl.u32 %v1036, 5
        %v1038 = vand.u32 %v1036, 31
        %v1039 = vsub.s32 32, %v1038
        %v1040 = vshrl.u32 683565275, %v1039
        %v1041 = vshll.u32 683565275, %v1038
        %v1042 = vshrl.u32 2475754826, %v1039
        %v1043 = vor.u32 %v1041, %v1042
        %v1044 = vshll.u32 2475754826, %v1038
        %v1045 = vshrl.u32 2131351028, %v1039
        %v1046 = vor.u32 %v1044, %v1045
        %v1047 = vshll.u32 2131351028, %v1038
        %v1048 = vshrl.u32 2102212464, %v1039
        %v1049 = vor.u32 %v1047, %v1048
        %v1050 = vshll.u32 2102212464, %v1038
        %v1051 = vshrl.u32 920167782, %v1039
        %v1052 = vor.u32 %v1050, %v1051
        %v1053 = vshll.u32 920167782, %v1038
        %v1054 = vshrl.u32 1326507024, %v1039
        %v1055 = vor.u32 %v1053, %v1054
        %vm1056 = vcmp.lt.s32.totalorder %v1037, 1
        %vm1057 = vcmp.lt.s32.totalorder %v1037, 2
        %vm1058 = vcmp.lt.s32.totalorder %v1037, 3
        %vm1059 = vcmp.lt.s32.totalorder %v1037, 4
        %v1060 = vsel %vm1056, %v1040, %v1043
        %v1061 = vsel %vm1059, %v1049, 2102212464
        %v1062 = vsel %vm1058, %v1046, %v1061
        %v1063 = vsel %vm1057, %v1060, %v1062
        %v1064 = vsel %vm1056, %v1043, %v1046
        %v1065 = vsel %vm1059, %v1052, 920167782
        %v1066 = vsel %vm1058, %v1049, %v1065
        %v1067 = vsel %vm1057, %v1064, %v1066
        %v1068 = vsel %vm1056, %v1046, %v1049
        %v1069 = vsel %vm1059, %v1055, 1326507024
        %v1070 = vsel %vm1058, %v1052, %v1069
        %v1071 = vsel %vm1057, %v1068, %v1070
        %v1072 = vshll.u32 %v1032, 8
        %v1073 = vmul.u32.u64.compose %v1072, %v1071
        %v1074 = vextract.low.u32 %v1073
        %v1075 = vextract.high.u32 %v1073
        %v1076 = vmul.u32.u64.compose %v1072, %v1067
        %v1077 = vextract.low.u32 %v1076
        %v1078 = vextract.high.u32 %v1076
        %v1079 = vmul.u32 %v1072, %v1063
        %v1080 = vadd.s32 %v1075, %v1077
        %vm1081 = vc.u32 %v1075, %v1077
        %v1082 = vadd.s32 %v1078, 1
        %v1083 = vsel %vm1081, %v1082, %v1078
        %v1084 = vadd.s32 %v1079, %v1083
        %v1085 = vadd.s32 %v1084, 536870912
        %v1086 = vshrl.u32 %v1085, 30
        %v1087 = vshll.u32 %v1086, 30
        %v1088 = vsub.s32 %v1084, %v1087
        %vm1089 = vcmp.lt.s32.totalorder %v1088, 0
        %v1090 = vsub.s32 0, %v1088
        %v1091 = vsel %vm1089, %v1090, %v1088
        %v1092 = vclz %v1091
        %v1093 = vsub.s32 %v1092, 2
        %vm1094 = vcmp.gt.s32.totalorder 0, %v1093
        %v1095 = vsel %vm1094, 0, %v1093
        %v1096 = vsub.s32 32, %v1095
        %v1097 = vshll.u32 %v1088, %v1095
        %v1098 = vshrl.u32 %v1080, %v1096
        %v1099 = vor.u32 %v1097, %v1098
        %v1100 = vsub.s32 4294967266, %v1095
        %v1101 = vadd.s32 %v1100, 127
        %v1102 = vshll.u32 %v1101, 23
        %v1103 = vor.u32 4788187, %v1102
        %v1104 = vand.u32 2147483647, %v1103
        %v1106 = vcvt.s32.f32 %v1099
        %v1107 = vmul.f32 %v1106, %v1104
        %v1108 = vxor.u32 %v1107, 2147483648
        %v1109 = vsel %vm1026, %v1108, %v1107
        %v1110 = vsub.s32 4, %v1086
        %v1111 = vsel %vm1026, %v1110, %v1086
        %v1112 = vsel %vm1025, %v295, %v1109
        %v1113 = vsel %vm1025, 0, %v1111
        %v1114 = vcosq.f32.pop %v1112
        %v1115 = vsinq.f32.pop %v1112
        %vm1116 = vweird.f32 %v295
        %v1117 = vadd.s32 %v1113, 3
        %v1118 = vand.u32 %v1117, 3
        %vm1119 = vcmp.lt.s32.totalorder %v1118, 2
        %vm1120 = vcmp.eq.s32.totalorder %v1118, 0
        %v1121 = vxor.u32 %v1115, 2147483648
        %v1122 = vsel %vm1120, %v1114, %v1121
        %vm1123 = vcmp.eq.s32.totalorder %v1118, 2
        %v1124 = vxor.u32 %v1114, 2147483648
        %v1125 = vsel %vm1123, %v1124, %v1115
        %v1126 = vsel %vm1119, %v1122, %v1125
        %v1127 = vsel %vm1116, nan, %v1126
        %1128 = vst [vmem:[%s205] sm:$0xff] %v399
        %1129 = vst [vmem:[%s205 + $0x8] sm:$0xff] %v503
        %1130 = vst [vmem:[%s205 + $0x10] sm:$0xff] %v607
        %1131 = vst [vmem:[%s205 + $0x18] sm:$0xff] %v711
        %1132 = vst [vmem:[%s205 + $0x20] sm:$0xff] %v815
        %1133 = vst [vmem:[%s205 + $0x28] sm:$0xff] %v919
        %1134 = vst [vmem:[%s205 + $0x30] sm:$0xff] %v1023
        %1135 = vst [vmem:[%s205 + $0x38] sm:$0xff] %v1127
        %s1136 = sand.u32 %s120, 1
        %s1137 = scalar_lea.sflag [#allocation3], %s1136
        %s1138 = sand.u32 %s120, 1
        %s1139 = smul.addr %s1138, 64
        %s1140 = scalar_lea.vmem [#allocation2], %s1139
        // Predicated region
        $region33: #{tpu_custom_call.1} parent=31 // pred_check
          %p1141 = pneg %p130
        $region34: #{tpu_custom_call.1} parent=31 // pred_check_branch
          %1143 = sbr.rel (%p1141) target = $region36
        $region35: #{tpu_custom_call.1} parent=31 // pred_region
          %s1144 = smul.u32 2, %s24
          %s1146 = ssub.s32 1024, 1024
          %1147 = vsyncadd %s1137, %s1146
          %s1148 = smul.addr %s23, 8
          %s1149 = sadd.s32 %s1144, %s1148
          %s1150 = smul.addr %s22, 16
          %s1151 = sadd.s32 %s1149, %s1150
          %s1152 = smul.addr %s1151, 128
          %s1153 = scalar_lea.hbm %s3, %s1152
          %s1154 = sshll.u32 %s1140, 4
          %s1155 = int_to_ptr.vmem [resolvable:$true] %s1154
          %1160 = dma.vmem_to_hbm [thread:$0]  %s1155, 1024, %s1153, %s1137, 256, 256, 16
        $region36: #{tpu_custom_call.1} parent=31 // pred_fallthru
          _
      $region32: #{tpu_custom_call.1} parent=5 // pred_fallthru
        _
      %p1161 = scmp.le.s32.totalorder 2, %s12
      // Predicated region
      $region37: #{tpu_custom_call.1} parent=5 // pred_check
        %p1162 = pneg %p1161
      $region38: #{tpu_custom_call.1} parent=5 // pred_check_branch
        %1164 = sbr.rel (%p1162) target = $region40
      $region39: #{tpu_custom_call.1} parent=5 // pred_region
        %s1165 = ssub.s32 %s12, 2
        // Predicated region
        $region41: #{tpu_custom_call.1} parent=39 // pred_check
          %p1166 = pneg %p136
        $region42: #{tpu_custom_call.1} parent=39 // pred_check_branch
          %1168 = sbr.rel (%p1166) target = $region44
        $region43: #{tpu_custom_call.1} parent=39 // pred_region
          %s1169 = sand.u32 %s121, 1
          %s1170 = scalar_lea.sflag [#allocation3], %s1169
          %s1171 = sand.u32 %s121, 1
          %s1172 = smul.addr %s1171, 64
          %s1173 = scalar_lea.vmem [#allocation2], %s1172
          %1174 = dma.done %s1170, 1024
        $region44: #{tpu_custom_call.1} parent=39 // pred_fallthru
          _
      $region40: #{tpu_custom_call.1} parent=5 // pred_fallthru
        _
    $region6: #{tpu_custom_call.1} parent=1 // loop_footer
      %s16 = sadd.s32 1, %s12
    $region7: #{tpu_custom_call.1} parent=1 // loop_footer_branch
      %11 = sbr.rel target = $region3
    $region8: #{tpu_custom_call.1} parent=1 // loop_exit
      _
    %1175 = vsyncpa [#allocation3], 1
    %s1176 = scalar_lea.sflag [#allocation3], 1
    %1177 = vsyncpa %s1176, 1

</llo_original>
